<compile_context>
chip_gen: v5e
topology: v5e:2x2
jax: 0.10.0
libtpu: 0.0.40
codegen_flags: <defaults>
</compile_context>

<pallas_src>
import functools

import jax
import jax.numpy as jnp
from jax.experimental import pallas as pl
from jax.experimental.pallas import tpu as pltpu

_LANES = 128  # lane width of one vreg row; the packed weight slab is 128 lanes wide


def _round_up(n, m):
    return ((n + m - 1) // m) * m


def _swallow_kernel(x_ref, p_ref, out_ref, *, d_pad, head_pad):
    """Fused 3-layer MLP; the three heads are fused into one matmul.

    p_ref layout (rows x 128 lanes, f32, EXACTLY zero outside valid regions):
      rows [0              : d_pad        ]  W1 (d_in, 32)              lanes [0:32]
      rows [d_pad          : d_pad + 128  ]  W2 (32, 16), rows 32.. = 0 lanes [0:16]
      rows [d_pad + 128    : d_pad + 256  ]  Wh = [Wmu|Wsig|Wc] (16, H),
                                             rows 16.. = 0              lanes [0:H]
      rows [d_pad + 256    : d_pad + 264  ]  biases: row0=b1, row1=b2, row2=bh
    """
    x = x_ref[...]                                   # (TM, d_pad)

    w1 = p_ref[0:d_pad, :]                           # (d_pad, 128)
    w2 = p_ref[d_pad:d_pad + 128, :]                 # (128, 128), full-K
    wh = p_ref[d_pad + 128:d_pad + 256, :]           # (128, 128), full-K
    bias = p_ref[d_pad + 256:d_pad + 264, :]         # (8, 128) aligned block
    b1 = bias[0:1, :]
    b2 = bias[1:2, :]
    bh = bias[2:3, :]

    # layer1: Linear(D_in, 32) + ReLU.  Lanes >= 32 stay exactly 0
    # (zero weight columns + zero bias padding + ReLU(0) == 0).
    h1 = jnp.maximum(jnp.dot(x, w1, preferred_element_type=jnp.float32) + b1, 0.0)
    # layer2: Linear(32, 16) + ReLU, full-K matmul (zero rows of W2 contribute 0).
    h2 = jnp.maximum(jnp.dot(h1, w2, preferred_element_type=jnp.float32) + b2, 0.0)
    # fused heads [mu | sigma | critic]: one matmul, then store only the narrow
    # head_pad lanes (out_ref is (TM, head_pad), not a 128-lane slab).
    y = jnp.dot(h2, wh, preferred_element_type=jnp.float32) + bh     # (TM, 128)
    out_ref[...] = y[:, 0:head_pad].astype(out_ref.dtype)


def _pack_params(params, d_in, d_pad, head_w):
    """Pack all weights/biases into one zero-padded (rows, 128) f32 slab.

    CORRECTNESS INVARIANT: every element outside the valid regions MUST be
    exactly zero.  The kernel runs full-K (128-wide) matmuls for layers 2/3
    and relies on (a) zero padded weight rows/columns and (b) zero padded bias
    lanes plus ReLU(0) == 0 to keep the padded lanes of h1/h2 at exactly 0.
    A non-ReLU activation or nonzero bias padding would silently corrupt heads.
    """
    rows = d_pad + 128 + 128 + 8
    slab = jnp.zeros((rows, _LANES), jnp.float32)
    slab = slab.at[0:d_in, 0:32].set(params["w1"].astype(jnp.float32))
    slab = slab.at[d_pad:d_pad + 32, 0:16].set(params["w2"].astype(jnp.float32))
    wh = jnp.concatenate([params["wmu"], params["wsig"], params["wc"]], axis=1)
    slab = slab.at[d_pad + 128:d_pad + 144, 0:head_w].set(wh.astype(jnp.float32))
    slab = slab.at[d_pad + 256, 0:32].set(params["b1"][0].astype(jnp.float32))
    slab = slab.at[d_pad + 257, 0:16].set(params["b2"][0].astype(jnp.float32))
    bh = jnp.concatenate([params["bmu"], params["bsig"], params["bc"]], axis=1)
    slab = slab.at[d_pad + 258, 0:head_w].set(bh[0].astype(jnp.float32))
    return slab


@functools.partial(jax.jit, static_argnames=("actor_shape", "critic_shape", "block_m"))
def swallow_actor_critic(x, params, *, actor_shape, critic_shape, block_m=4096):
    """x: (B, D_in) float32. Returns (actor_mu, actor_sigma, critic)."""
    B, d_in = x.shape
    head_w = 2 * actor_shape + critic_shape
    head_pad = _round_up(head_w, 8)
    assert head_pad <= _LANES, "fused head width must fit in 128 lanes"

    d_pad = _round_up(d_in, 8)
    slab = _pack_params(params, d_in, d_pad, head_w)

    # ---- batch tiling -------------------------------------------------------
    b8 = _round_up(B, 8)
    if b8 <= 8:
        # Tiny-batch fast path: one tile, one grid step (no pipelining machinery).
        tm = 8
    elif b8 <= block_m:
        # Whole batch fits in one tile: split into two tiles anyway so that both
        # TensorCores get work on v7x under dimension_semantics=("parallel",).
        tm = _round_up(pl.cdiv(b8, 2), 8)
    else:
        tm = block_m
    b_pad = _round_up(B, tm)

    x_p = x.astype(jnp.float32)
    if (b_pad, d_pad) != (B, d_in):
        x_p = jnp.pad(x_p, ((0, b_pad - B), (0, d_pad - d_in)))

    grid = (b_pad // tm,)

    # Honest traffic estimate for the narrow output (not a 128-lane slab).
    flops = 2 * b_pad * (d_pad * 128 + 128 * 128 + 128 * 128)
    bytes_accessed = (b_pad * d_pad + slab.size + b_pad * head_pad) * 4

    out = pl.pallas_call(
        functools.partial(_swallow_kernel, d_pad=d_pad, head_pad=head_pad),
        out_shape=jax.ShapeDtypeStruct((b_pad, head_pad), jnp.float32),
        grid=grid,
        in_specs=[
            pl.BlockSpec((tm, d_pad), lambda i: (i, 0)),    # x: tiled over batch
            pl.BlockSpec(slab.shape, lambda i: (0, 0)),     # params: resident block
        ],
        out_specs=pl.BlockSpec((tm, head_pad), lambda i: (i, 0)),
        compiler_params=pltpu.CompilerParams(
            dimension_semantics=("parallel",),              # shard batch across TCs
        ),
        cost_estimate=pl.CostEstimate(
            flops=flops, transcendentals=0, bytes_accessed=bytes_accessed),
    )(x_p, slab)

    # Cheap slicing in XLA: split the narrow output into the three heads.
    mu = out[:B, 0:actor_shape]
    sigma = out[:B, actor_shape:2 * actor_shape]
    critic = out[:B, 2 * actor_shape:2 * actor_shape + critic_shape]
    return mu, sigma, critic


def init_params(key, input_dim, actor_shape, critic_shape):
    """Deterministic synthetic init (PyTorch-like uniform fan_in scaling).

    Weights are stored as (in, out) = W.T relative to torch.nn.Linear.
    Biases are stored as (1, out).
    """
    def linear(key, fan_in, fan_out):
        kw, kb = jax.random.split(key)
        bound = 1.0 / jnp.sqrt(float(fan_in))
        w = jax.random.uniform(kw, (fan_in, fan_out), jnp.float32, -bound, bound)
        b = jax.random.uniform(kb, (1, fan_out), jnp.float32, -bound, bound)
        return w, b

    k1, k2, k3, k4, k5 = jax.random.split(key, 5)
    w1, b1 = linear(k1, input_dim, 32)
    w2, b2 = linear(k2, 32, 16)
    wmu, bmu = linear(k3, 16, actor_shape)
    wsig, bsig = linear(k4, 16, actor_shape)
    wc, bc = linear(k5, 16, critic_shape)
    return {
        "w1": w1, "b1": b1,
        "w2": w2, "b2": b2,
        "wmu": wmu, "bmu": bmu,
        "wsig": wsig, "bsig": bsig,
        "wc": wc, "bc": bc,
    }


def reference_forward(x, params):
    h1 = jnp.maximum(x @ params["w1"] + params["b1"], 0.0)
    h2 = jnp.maximum(h1 @ params["w2"] + params["b2"], 0.0)
    mu = h2 @ params["wmu"] + params["bmu"]
    sigma = h2 @ params["wsig"] + params["bsig"]
    critic = h2 @ params["wc"] + params["bc"]
    return mu, sigma, critic


def _check(x, params, actor_shape, critic_shape, tag):
    mu, sigma, critic = swallow_actor_critic(
        x, params, actor_shape=actor_shape, critic_shape=critic_shape)
    jax.block_until_ready((mu, sigma, critic))
    ref_mu, ref_sigma, ref_critic = reference_forward(x, params)
    assert mu.shape == ref_mu.shape and sigma.shape == ref_sigma.shape
    assert critic.shape == ref_critic.shape
    assert jnp.allclose(mu, ref_mu, atol=1e-5), f"actor_mu mismatch ({tag})"
    assert jnp.allclose(sigma, ref_sigma, atol=1e-5), f"actor_sigma mismatch ({tag})"
    assert jnp.allclose(critic, ref_critic, atol=1e-5), f"critic mismatch ({tag})"


if __name__ == "__main__":
    key = jax.random.PRNGKey(0)
    k_param, k_x1, k_x2 = jax.random.split(key, 3)

    # Small shapes consistent with the module: input_shape=(4,), actor_shape=2, critic_shape=1
    input_dim, actor_shape, critic_shape = 4, 2, 1
    params = init_params(k_param, input_dim, actor_shape, critic_shape)

    # Tiny batch (single-tile fast path) — the module's typical RL inference case.
    x_small = jax.random.normal(k_x1, (8, input_dim), jnp.float32)
    _check(x_small, params, actor_shape, critic_shape, "B=8")

    # Larger, non-multiple batch (multi-tile grid + batch padding path).
    x_large = jax.random.normal(k_x2, (300, input_dim), jnp.float32)
    _check(x_large, params, actor_shape, critic_shape, "B=300")

    print("KERNEL_OK")
</pallas_src>

<mosaic_0001>
module attributes {stable_mosaic.version = 11 : i64} {
  func.func @_swallow_kernel(%arg0: i32, %arg1: memref<8x8xf32, #tpu.memory_space<vmem>>, %arg2: memref<272x128xf32, #tpu.memory_space<vmem>>, %arg3: memref<8x8xf32, #tpu.memory_space<vmem>>) attributes {dimension_semantics = [#tpu.dimension_semantics<parallel>], iteration_bounds = array<i64: 1>, scalar_prefetch = 0 : i64, scratch_operands = 0 : i64, tpu.core_type = #tpu.core_type<tc>, window_params = [{transform_indices = @transform_0, window_bounds = array<i64: 8, 8>}, {pipeline_mode = #tpu.pipeline_mode<synchronous>, transform_indices = @transform_1, window_bounds = array<i64: 272, 128>}, {transform_indices = @transform_2, window_bounds = array<i64: 8, 8>}]} {
    %c0 = arith.constant 0 : index
    %c0_0 = arith.constant 0 : index
    %0 = vector.load %arg1[%c0, %c0_0] : memref<8x8xf32, #tpu.memory_space<vmem>>, vector<8x8xf32>
    %c0_1 = arith.constant 0 : index
    %c0_2 = arith.constant 0 : index
    %1 = vector.load %arg2[%c0_1, %c0_2] : memref<272x128xf32, #tpu.memory_space<vmem>>, vector<8x128xf32>
    %c8 = arith.constant 8 : index
    %c0_3 = arith.constant 0 : index
    %2 = vector.load %arg2[%c8, %c0_3] : memref<272x128xf32, #tpu.memory_space<vmem>>, vector<128x128xf32>
    %c136 = arith.constant 136 : index
    %c0_4 = arith.constant 0 : index
    %3 = vector.load %arg2[%c136, %c0_4] : memref<272x128xf32, #tpu.memory_space<vmem>>, vector<128x128xf32>
    %c264 = arith.constant 264 : index
    %c0_5 = arith.constant 0 : index
    %4 = vector.load %arg2[%c264, %c0_5] : memref<272x128xf32, #tpu.memory_space<vmem>>, vector<8x128xf32>
    %5 = vector.extract_strided_slice %4 {offsets = [0, 0], sizes = [1, 128], strides = [1, 1]} : vector<8x128xf32> to vector<1x128xf32>
    %6 = vector.extract_strided_slice %4 {offsets = [1, 0], sizes = [1, 128], strides = [1, 1]} : vector<8x128xf32> to vector<1x128xf32>
    %7 = vector.extract_strided_slice %4 {offsets = [2, 0], sizes = [1, 128], strides = [1, 1]} : vector<8x128xf32> to vector<1x128xf32>
    %cst = arith.constant dense<0.000000e+00> : vector<8x128xf32>
    %8 = tpu.matmul %0, %1, %cst {dimension_numbers = #tpu.dot_dimension_numbers<[1], [0], [0], [1], [0, 0, 1, 1], [], []>} : vector<8x8xf32>, vector<8x128xf32>, vector<8x128xf32> -> vector<8x128xf32>
    %9 = vector.broadcast %5 : vector<1x128xf32> to vector<8x128xf32>
    %10 = arith.addf %8, %9 : vector<8x128xf32>
    %cst_6 = arith.constant 0.000000e+00 : f32
    %11 = vector.broadcast %cst_6 : f32 to vector<8x128xf32>
    %12 = arith.maximumf %10, %11 : vector<8x128xf32>
    %cst_7 = arith.constant dense<0.000000e+00> : vector<8x128xf32>
    %13 = tpu.matmul %12, %2, %cst_7 {dimension_numbers = #tpu.dot_dimension_numbers<[1], [0], [0], [1], [0, 0, 1, 1], [], []>} : vector<8x128xf32>, vector<128x128xf32>, vector<8x128xf32> -> vector<8x128xf32>
    %14 = vector.broadcast %6 : vector<1x128xf32> to vector<8x128xf32>
    %15 = arith.addf %13, %14 : vector<8x128xf32>
    %cst_8 = arith.constant 0.000000e+00 : f32
    %16 = vector.broadcast %cst_8 : f32 to vector<8x128xf32>
    %17 = arith.maximumf %15, %16 : vector<8x128xf32>
    %cst_9 = arith.constant dense<0.000000e+00> : vector<8x128xf32>
    %18 = tpu.matmul %17, %3, %cst_9 {dimension_numbers = #tpu.dot_dimension_numbers<[1], [0], [0], [1], [0, 0, 1, 1], [], []>} : vector<8x128xf32>, vector<128x128xf32>, vector<8x128xf32> -> vector<8x128xf32>
    %19 = vector.broadcast %7 : vector<1x128xf32> to vector<8x128xf32>
    %20 = arith.addf %18, %19 : vector<8x128xf32>
    %21 = vector.extract_strided_slice %20 {offsets = [0, 0], sizes = [8, 8], strides = [1, 1]} : vector<8x128xf32> to vector<8x8xf32>
    %c0_10 = arith.constant 0 : index
    %c0_11 = arith.constant 0 : index
    %22 = vector.load %arg3[%c0_10, %c0_11] : memref<8x8xf32, #tpu.memory_space<vmem>>, vector<8x8xf32>
    tpu.vector_store %arg3[%c0_10, %c0_11], %21 {strides = array<i32>} : memref<8x8xf32, #tpu.memory_space<vmem>>, vector<8x8xf32>,
    return
  }
  func.func @transform_0(%arg0: i32) -> (i32, i32) {
    %c0_i32 = arith.constant 0 : i32
    %c0_i32_0 = arith.constant 0 : i32
    return %arg0, %c0_i32 : i32, i32
  }
  func.func @transform_1(%arg0: i32) -> (i32, i32) {
    %c0_i32 = arith.constant 0 : i32
    %c0_i32_0 = arith.constant 0 : i32
    %c0_i32_1 = arith.constant 0 : i32
    return %c0_i32, %c0_i32_0 : i32, i32
  }
  func.func @transform_2(%arg0: i32) -> (i32, i32) {
    %c0_i32 = arith.constant 0 : i32
    %c0_i32_0 = arith.constant 0 : i32
    return %arg0, %c0_i32 : i32, i32
  }
}

</mosaic_0001>

<llo_original>
// kernel: swallow_actor_critic.1
$region0: #{swallow_actor_critic.1}
  #allocation0 [shape = 'u32[]', space=smem, size = 0x4, offset = 0x4, fixed_abs, tag = 'smem constant byte address 0x4 - core index']
  #allocation1 [shape = 'u32[72,128]{1,0:T(1,128)}', space=vmem, size = 0x9000, scoped, tag = 'internal scratch']
  %s0 = inlined_call_operand.vmem [shape: f32[8,8], index: 0, kind: input, shape index: {}]
  %s1 = inlined_call_operand.vmem [shape: f32[272,128], index: 1, kind: input, shape index: {}]
  %s2 = inlined_call_operand.vmem [shape: f32[8,8], index: 2, kind: output, shape index: {}]
  %s3 = sld [smem:[#allocation0]]
  $region18: #{swallow_actor_critic.1} parent=0
    _
  %s5 = ssub.s32 1, %s3
  %s6 = scalar_select 0, %s5, %s3
  // Predicated region
  $region2: #{swallow_actor_critic.1} parent=0 // pred_check
    _
  $region3: #{swallow_actor_critic.1} parent=0 // pred_check_branch
    %8 = sbr.rel (0) target = $region5
  $region4: #{swallow_actor_critic.1} parent=0 // pred_region
    _
  $region5: #{swallow_actor_critic.1} parent=0 // pred_fallthru
    _
  // Predicated region
  $region6: #{swallow_actor_critic.1} parent=0 // pred_check
    _
  $region7: #{swallow_actor_critic.1} parent=0 // pred_check_branch
    %10 = sbr.rel (0) target = $region9
  $region8: #{swallow_actor_critic.1} parent=0 // pred_region
    _
  $region9: #{swallow_actor_critic.1} parent=0 // pred_fallthru
    _
  %v11 = vld [vmem:[%s0] sm:$0xff]
  %v12 = vld [vmem:[%s1] sm:$0xff]
  %v13 = vld [vmem:[%s1 + $0x8] sm:$0xff]
  %v14 = vld [vmem:[%s1 + $0x10] sm:$0xff]
  %v15 = vld [vmem:[%s1 + $0x18] sm:$0xff]
  %v16 = vld [vmem:[%s1 + $0x20] sm:$0xff]
  %v17 = vld [vmem:[%s1 + $0x28] sm:$0xff]
  %v18 = vld [vmem:[%s1 + $0x30] sm:$0xff]
  %v19 = vld [vmem:[%s1 + $0x38] sm:$0xff]
  %v20 = vld [vmem:[%s1 + $0x40] sm:$0xff]
  %v21 = vld [vmem:[%s1 + $0x48] sm:$0xff]
  %v22 = vld [vmem:[%s1 + $0x50] sm:$0xff]
  %v23 = vld [vmem:[%s1 + $0x58] sm:$0xff]
  %v24 = vld [vmem:[%s1 + $0x60] sm:$0xff]
  %v25 = vld [vmem:[%s1 + $0x68] sm:$0xff]
  %v26 = vld [vmem:[%s1 + $0x70] sm:$0xff]
  %v27 = vld [vmem:[%s1 + $0x78] sm:$0xff]
  %v28 = vld [vmem:[%s1 + $0x80] sm:$0xff]
  %v29 = vld [vmem:[%s1 + $0x88] sm:$0xff]
  %v30 = vld [vmem:[%s1 + $0x90] sm:$0xff]
  %v31 = vld [vmem:[%s1 + $0x98] sm:$0xff]
  %v32 = vld [vmem:[%s1 + $0xa0] sm:$0xff]
  %v33 = vld [vmem:[%s1 + $0xa8] sm:$0xff]
  %v34 = vld [vmem:[%s1 + $0xb0] sm:$0xff]
  %v35 = vld [vmem:[%s1 + $0xb8] sm:$0xff]
  %v36 = vld [vmem:[%s1 + $0xc0] sm:$0xff]
  %v37 = vld [vmem:[%s1 + $0xc8] sm:$0xff]
  %v38 = vld [vmem:[%s1 + $0xd0] sm:$0xff]
  %v39 = vld [vmem:[%s1 + $0xd8] sm:$0xff]
  %v40 = vld [vmem:[%s1 + $0xe0] sm:$0xff]
  %v41 = vld [vmem:[%s1 + $0xe8] sm:$0xff]
  %v42 = vld [vmem:[%s1 + $0xf0] sm:$0xff]
  %v43 = vld [vmem:[%s1 + $0xf8] sm:$0xff]
  %v44 = vld [vmem:[%s1 + $0x100] sm:$0xff]
  %v45 = vld [vmem:[%s1 + $0x108] sm:$0xff]
  %v46 = vperm.slane %v45, 0
  %vm47 = vcmask 64512
  %v49 = vsel %vm47, %v11, 0
  %51 = vmatpush.msra.mxu0 0.0
  %52 = vmatpush.msra.mxu0 0.0
  %53 = vmatpush.msra.mxu0 0.0
  %54 = vmatpush.msra.mxu0 0.0
  %55 = vmatpush.msra.mxu0 0.0
  %56 = vmatpush.msra.mxu0 0.0
  %57 = vmatpush.msra.mxu0 0.0
  %58 = vmatpush.msra.mxu0 0.0
  %59 = vmatpush.msra.mxu0 0.0
  %60 = vmatpush.msra.mxu0 0.0
  %61 = vmatpush.msra.mxu0 0.0
  %62 = vmatpush.msra.mxu0 0.0
  %63 = vmatpush.msra.mxu0 0.0
  %64 = vmatpush.msra.mxu0 0.0
  %65 = vmatpush.msra.mxu0 0.0
  %66 = vmatpush.msra.mxu0 %v12
  %67 = vmatmul.f32.gmra.mxu0 %v49
  %v68 = vpop.f32.mrf.mxu0
  %v69 = vadd.f32 %v46, %v68
  %70 = vdwg.mxu0
  %v71 = vmax.f32 %v69, 0.0
  %v72 = vperm.slane %v45, 1
  %73 = vmatpush.msra.mxu0 %v28
  %74 = vmatpush.msra.mxu0 %v27
  %75 = vmatpush.msra.mxu0 %v26
  %76 = vmatpush.msra.mxu0 %v25
  %77 = vmatpush.msra.mxu0 %v24
  %78 = vmatpush.msra.mxu0 %v23
  %79 = vmatpush.msra.mxu0 %v22
  %80 = vmatpush.msra.mxu0 %v21
  %81 = vmatpush.msra.mxu0 %v20
  %82 = vmatpush.msra.mxu0 %v19
  %83 = vmatpush.msra.mxu0 %v18
  %84 = vmatpush.msra.mxu0 %v17
  %85 = vmatpush.msra.mxu0 %v16
  %86 = vmatpush.msra.mxu0 %v15
  %87 = vmatpush.msra.mxu0 %v14
  %88 = vmatpush.msra.mxu0 %v13
  %89 = vmatmul.f32.gmra.mxu0 %v71
  %v90 = vpop.f32.mrf.mxu0
  %v91 = vadd.f32 %v72, %v90
  %92 = vdwg.mxu0
  %v93 = vmax.f32 %v91, 0.0
  %v94 = vperm.slane %v45, 2
  %95 = vmatpush.msra.mxu0 %v44
  %96 = vmatpush.msra.mxu0 %v43
  %97 = vmatpush.msra.mxu0 %v42
  %98 = vmatpush.msra.mxu0 %v41
  %99 = vmatpush.msra.mxu0 %v40
  %100 = vmatpush.msra.mxu0 %v39
  %101 = vmatpush.msra.mxu0 %v38
  %102 = vmatpush.msra.mxu0 %v37
  %103 = vmatpush.msra.mxu0 %v36
  %104 = vmatpush.msra.mxu0 %v35
  %105 = vmatpush.msra.mxu0 %v34
  %106 = vmatpush.msra.mxu0 %v33
  %107 = vmatpush.msra.mxu0 %v32
  %108 = vmatpush.msra.mxu0 %v31
  %109 = vmatpush.msra.mxu0 %v30
  %110 = vmatpush.msra.mxu0 %v29
  %111 = vmatmul.f32.gmra.mxu0 %v93
  %v112 = vpop.f32.mrf.mxu0
  %v113 = vadd.f32 %v94, %v112
  %114 = vdwg.mxu0
  %115 = vst.msk [vmem:[%s2] sm:$0xff] %vm47, %v113
  // Predicated region
  $region10: #{swallow_actor_critic.1} parent=0 // pred_check
    _
  $region11: #{swallow_actor_critic.1} parent=0 // pred_check_branch
    %117 = sbr.rel (0) target = $region13
  $region12: #{swallow_actor_critic.1} parent=0 // pred_region
    _
  $region13: #{swallow_actor_critic.1} parent=0 // pred_fallthru
    _
  // Predicated region
  $region14: #{swallow_actor_critic.1} parent=0 // pred_check
    _
  $region15: #{swallow_actor_critic.1} parent=0 // pred_check_branch
    %119 = sbr.rel (0) target = $region17
  $region16: #{swallow_actor_critic.1} parent=0 // pred_region
    _
  $region17: #{swallow_actor_critic.1} parent=0 // pred_fallthru
    _

</llo_original>
